<compile_context>
chip_gen: v5e
topology: v5e:2x2
jax: 0.10.0
libtpu: 0.0.40
codegen_flags: <defaults>
</compile_context>

<pallas_src>
import functools

import jax
import jax.numpy as jnp
from jax.experimental import pallas as pl
from jax.experimental.pallas import tpu as pltpu

_SUBLANES = 8
_LANES = 128
_MAX_BLOCK_ROWS = 2048        # (2048, 128) f32 = 1 MiB per input per pipeline buffer
_NUM_CORES = 2                # v7x megacore split; harmless serial loop on 1-TC chips
_PALLAS_MIN_TASKS = 65536     # below this, the inline jnp form wins (launch overhead)


def _awl_kernel(params_ref, loss_ref, out_ref, acc_ref, *, num_tasks,
                block_rows, blocks_per_core):
    """Processes one contiguous (block_rows, 128) chunk of the padded task axis."""
    i = pl.program_id(0)      # parallel shard (one per TensorCore on v7x)
    k = pl.program_id(1)      # streaming reduction axis

    # Resident (8, 128) accumulator: zero it at the start of each core's stream.
    @pl.when(k == 0)
    def _():
        acc_ref[...] = jnp.zeros_like(acc_ref)

    p = params_ref[...]
    p2 = p * p
    # EUP reciprocal instead of a VPU divide; approx=False keeps the self-check tight.
    contrib = (0.5 * pl.reciprocal(p2, approx=False)) * loss_ref[...] \
        + jnp.log(1.0 + p2)

    def _reduce_rows(x):
        # (block_rows, 128) -> (8, 128) lane/sublane partial sums. The reshape
        # only groups whole (8, 128) tiles, so this lowers to plain vreg adds.
        if block_rows == _SUBLANES:
            return x
        return jnp.sum(
            x.reshape(block_rows // _SUBLANES, _SUBLANES, _LANES), axis=0)

    # Flat task index of this block's first element (contiguous layout).
    # int32 is fine unless the padded task count approaches 2**31.
    block_elems = block_rows * _LANES
    start = (i * blocks_per_core + k) * block_elems
    fully_valid = start + block_elems <= num_tasks

    @pl.when(fully_valid)                    # steady state: no masking work
    def _():
        acc_ref[...] += _reduce_rows(contrib)

    @pl.when(jnp.logical_not(fully_valid))   # boundary / fully-padded blocks only
    def _():
        rows = jax.lax.broadcasted_iota(jnp.int32, contrib.shape, 0)
        cols = jax.lax.broadcasted_iota(jnp.int32, contrib.shape, 1)
        flat = start + rows * _LANES + cols
        acc_ref[...] += _reduce_rows(jnp.where(flat < num_tasks, contrib, 0.0))

    # Single lane-dense store per core, only on the last step of its stream.
    @pl.when(k == pl.num_programs(1) - 1)
    def _():
        out_ref[0] = acc_ref[...]


def _automatic_weighted_loss_pallas(params: jax.Array,
                                    losses: jax.Array) -> jax.Array:
    """Pallas path: params (num,) f32, losses (num,) f32 -> scalar f32."""
    num = params.shape[0]

    # Lane-dense contiguous layout: (total_rows, 128), row blocks of block_rows.
    rows = pl.cdiv(num, _LANES)
    rows = pl.cdiv(rows, _SUBLANES) * _SUBLANES            # sublane-align
    block_rows = min(_MAX_BLOCK_ROWS, rows)                 # multiple of 8
    blocks_per_core = pl.cdiv(rows, _NUM_CORES * block_rows)
    total_rows = _NUM_CORES * blocks_per_core * block_rows
    padded = total_rows * _LANES

    # Pad params with 1.0 (keeps 1/p^2 finite) and losses with 0.0; the kernel
    # masks boundary blocks so padded slots contribute exactly 0.
    params2d = jnp.pad(params, (0, padded - num),
                       constant_values=1.0).reshape(total_rows, _LANES)
    losses2d = jnp.pad(losses, (0, padded - num),
                       constant_values=0.0).reshape(total_rows, _LANES)

    kernel = functools.partial(_awl_kernel, num_tasks=num,
                               block_rows=block_rows,
                               blocks_per_core=blocks_per_core)

    partials = pl.pallas_call(
        kernel,
        out_shape=jax.ShapeDtypeStruct((_NUM_CORES, _SUBLANES, _LANES),
                                       jnp.float32),
        grid_spec=pltpu.PrefetchScalarGridSpec(
            num_scalar_prefetch=0,
            grid=(_NUM_CORES, blocks_per_core),
            in_specs=[
                pl.BlockSpec((block_rows, _LANES),
                             lambda i, k: (i * blocks_per_core + k, 0)),
                pl.BlockSpec((block_rows, _LANES),
                             lambda i, k: (i * blocks_per_core + k, 0)),
            ],
            out_specs=pl.BlockSpec((1, _SUBLANES, _LANES),
                                   lambda i, k: (i, 0, 0)),
            scratch_shapes=[pltpu.VMEM((_SUBLANES, _LANES), jnp.float32)],
        ),
        compiler_params=pltpu.CompilerParams(
            dimension_semantics=("parallel", "arbitrary")),
    )(params2d, losses2d)

    # Final cross-core / cross-lane reduction (tiny: 2*8*128 elements).
    return jnp.sum(partials)


def automatic_weighted_loss_ref(params: jax.Array, losses: jax.Array):
    """Pure-jnp reference; preferred inline form when num is small."""
    p2 = params.astype(jnp.float32) ** 2
    return jnp.sum(0.5 / p2 * losses.astype(jnp.float32) + jnp.log(1.0 + p2))


def automatic_weighted_loss(params: jax.Array, losses: jax.Array, *,
                            force_pallas: bool = False) -> jax.Array:
    """params: (num,) , losses: (num,) -> scalar f32 loss sum."""
    num = params.shape[0]
    assert losses.shape == (num,)
    params = params.astype(jnp.float32)
    losses = losses.astype(jnp.float32)
    if num < _PALLAS_MIN_TASKS and not force_pallas:
        # Size gate: for small task counts the fused inline form is strictly
        # cheaper than a Pallas launch + HBM round trip of padded tiles.
        return automatic_weighted_loss_ref(params, losses)
    return _automatic_weighted_loss_pallas(params, losses)


if __name__ == "__main__":
    num_losses = 2

    # Deterministic parameter init, matching torch.ones(num) in __init__.
    params = jnp.ones((num_losses,), dtype=jnp.float32)

    # Small deterministic example "multi-task losses".
    key = jax.random.PRNGKey(0)
    losses = jax.random.uniform(key, (num_losses,), dtype=jnp.float32,
                                minval=0.5, maxval=2.0)

    # Force the Pallas path (the size gate would otherwise pick the inline
    # jnp form for num=2) so the kernel itself is exercised.
    result = automatic_weighted_loss(params, losses, force_pallas=True)
    result = jax.block_until_ready(result)

    ref = automatic_weighted_loss_ref(params, losses)
    assert jnp.allclose(result, ref, rtol=1e-5, atol=1e-5), (result, ref)

    # Also exercise the gated (inline) path once.
    gated = jax.block_until_ready(automatic_weighted_loss(params, losses))
    assert jnp.allclose(gated, ref, rtol=1e-6, atol=1e-6), (gated, ref)

    print("KERNEL_OK")
</pallas_src>

<mosaic_0001>
module attributes {stable_mosaic.version = 11 : i64} {
  func.func @_awl_kernel(%arg0: i32, %arg1: i32, %arg2: memref<8x128xf32, #tpu.memory_space<vmem>>, %arg3: memref<8x128xf32, #tpu.memory_space<vmem>>, %arg4: memref<1x8x128xf32, #tpu.memory_space<vmem>>, %arg5: memref<8x128xf32, #tpu.memory_space<vmem>>) attributes {dimension_semantics = [#tpu.dimension_semantics<parallel>, #tpu.dimension_semantics<arbitrary>], iteration_bounds = array<i64: 2, 1>, scalar_prefetch = 0 : i64, scratch_operands = 1 : i64, tpu.core_type = #tpu.core_type<tc>, window_params = [{transform_indices = @transform_0, window_bounds = array<i64: 8, 128>}, {transform_indices = @transform_1, window_bounds = array<i64: 8, 128>}, {transform_indices = @transform_2, window_bounds = array<i64: 1, 8, 128>}]} {
    %c0_i32 = arith.constant 0 : i32
    %0 = arith.cmpi eq, %arg1, %c0_i32 : i32
    %1 = arith.extui %0 : i1 to i32
    %c0_i32_0 = arith.constant 0 : i32
    %2 = arith.cmpi ne, %1, %c0_i32_0 : i32
    scf.if %2 {
      %cst_10 = arith.constant 0.000000e+00 : f32
      %27 = vector.broadcast %cst_10 : f32 to vector<8x128xf32>
      %c0_11 = arith.constant 0 : index
      %c0_12 = arith.constant 0 : index
      %28 = vector.load %arg5[%c0_11, %c0_12] : memref<8x128xf32, #tpu.memory_space<vmem>>, vector<8x128xf32>
      tpu.vector_store %arg5[%c0_11, %c0_12], %27 {strides = array<i32>} : memref<8x128xf32, #tpu.memory_space<vmem>>, vector<8x128xf32>,
    } else {
    }
    %c0 = arith.constant 0 : index
    %c0_1 = arith.constant 0 : index
    %3 = vector.load %arg2[%c0, %c0_1] : memref<8x128xf32, #tpu.memory_space<vmem>>, vector<8x128xf32>
    %4 = arith.mulf %3, %3 : vector<8x128xf32>
    %5 = tpu.reciprocal %4 : vector<8x128xf32> -> vector<8x128xf32>
    %cst = arith.constant 5.000000e-01 : f32
    %6 = vector.broadcast %cst : f32 to vector<8x128xf32>
    %7 = arith.mulf %6, %5 : vector<8x128xf32>
    %c0_2 = arith.constant 0 : index
    %c0_3 = arith.constant 0 : index
    %8 = vector.load %arg3[%c0_2, %c0_3] : memref<8x128xf32, #tpu.memory_space<vmem>>, vector<8x128xf32>
    %9 = arith.mulf %7, %8 : vector<8x128xf32>
    %cst_4 = arith.constant 1.000000e+00 : f32
    %10 = vector.broadcast %cst_4 : f32 to vector<8x128xf32>
    %11 = arith.addf %10, %4 : vector<8x128xf32>
    %12 = math.log %11 : vector<8x128xf32>
    %13 = arith.addf %9, %12 : vector<8x128xf32>
    %c1_i32 = arith.constant 1 : i32
    %14 = arith.muli %arg0, %c1_i32 : i32
    %15 = arith.addi %14, %arg1 : i32
    %c1024_i32 = arith.constant 1024 : i32
    %16 = arith.muli %15, %c1024_i32 : i32
    %c1024_i32_5 = arith.constant 1024 : i32
    %17 = arith.addi %16, %c1024_i32_5 : i32
    %c2_i32 = arith.constant 2 : i32
    %18 = arith.cmpi sle, %17, %c2_i32 : i32
    %19 = arith.extui %18 : i1 to i32
    %c0_i32_6 = arith.constant 0 : i32
    %20 = arith.cmpi ne, %19, %c0_i32_6 : i32
    scf.if %20 {
      %c0_10 = arith.constant 0 : index
      %c0_11 = arith.constant 0 : index
      %27 = vector.load %arg5[%c0_10, %c0_11] : memref<8x128xf32, #tpu.memory_space<vmem>>, vector<8x128xf32>
      %28 = arith.addf %27, %13 : vector<8x128xf32>
      %c0_12 = arith.constant 0 : index
      %c0_13 = arith.constant 0 : index
      %29 = vector.load %arg5[%c0_12, %c0_13] : memref<8x128xf32, #tpu.memory_space<vmem>>, vector<8x128xf32>
      tpu.vector_store %arg5[%c0_12, %c0_13], %28 {strides = array<i32>} : memref<8x128xf32, #tpu.memory_space<vmem>>, vector<8x128xf32>,
    } else {
    }
    %true = arith.constant true
    %21 = arith.xori %18, %true : i1
    %22 = arith.extui %21 : i1 to i32
    %c0_i32_7 = arith.constant 0 : i32
    %23 = arith.cmpi ne, %22, %c0_i32_7 : i32
    scf.if %23 {
      %27 = tpu.iota {dimensions = array<i32: 0>} : vector<8x128xi32>
      %28 = tpu.iota {dimensions = array<i32: 1>} : vector<8x128xi32>
      %c128_i32 = arith.constant 128 : i32
      %29 = vector.broadcast %c128_i32 : i32 to vector<8x128xi32>
      %30 = arith.muli %27, %29 : vector<8x128xi32>
      %31 = vector.broadcast %16 : i32 to vector<8x128xi32>
      %32 = arith.addi %31, %30 : vector<8x128xi32>
      %33 = arith.addi %32, %28 : vector<8x128xi32>
      %c0_10 = arith.constant 0 : index
      %c0_11 = arith.constant 0 : index
      %34 = vector.load %arg5[%c0_10, %c0_11] : memref<8x128xf32, #tpu.memory_space<vmem>>, vector<8x128xf32>
      %c2_i32_12 = arith.constant 2 : i32
      %35 = vector.broadcast %c2_i32_12 : i32 to vector<8x128xi32>
      %36 = arith.cmpi slt, %33, %35 : vector<8x128xi32>
      %cst_13 = arith.constant 0.000000e+00 : f32
      %37 = vector.broadcast %cst_13 : f32 to vector<8x128xf32>
      %38 = arith.select %36, %13, %37 : vector<8x128xi1>, vector<8x128xf32>
      %39 = arith.addf %34, %38 : vector<8x128xf32>
      %c0_14 = arith.constant 0 : index
      %c0_15 = arith.constant 0 : index
      %40 = vector.load %arg5[%c0_14, %c0_15] : memref<8x128xf32, #tpu.memory_space<vmem>>, vector<8x128xf32>
      tpu.vector_store %arg5[%c0_14, %c0_15], %39 {strides = array<i32>} : memref<8x128xf32, #tpu.memory_space<vmem>>, vector<8x128xf32>,
    } else {
    }
    %c0_i32_8 = arith.constant 0 : i32
    %24 = arith.cmpi eq, %arg1, %c0_i32_8 : i32
    %25 = arith.extui %24 : i1 to i32
    %c0_i32_9 = arith.constant 0 : i32
    %26 = arith.cmpi ne, %25, %c0_i32_9 : i32
    scf.if %26 {
      %c0_10 = arith.constant 0 : index
      %c0_11 = arith.constant 0 : index
      %27 = vector.load %arg5[%c0_10, %c0_11] : memref<8x128xf32, #tpu.memory_space<vmem>>, vector<8x128xf32>
      %c0_12 = arith.constant 0 : index
      %c0_13 = arith.constant 0 : index
      %c0_14 = arith.constant 0 : index
      %28 = vector.load %arg4[%c0_12, %c0_13, %c0_14] : memref<1x8x128xf32, #tpu.memory_space<vmem>>, vector<1x8x128xf32>
      %29 = vector.shape_cast %28 : vector<1x8x128xf32> to vector<8x128xf32>
      %30 = vector.shape_cast %27 : vector<8x128xf32> to vector<1x8x128xf32>
      tpu.vector_store %arg4[%c0_12, %c0_13, %c0_14], %30 {strides = array<i32>} : memref<1x8x128xf32, #tpu.memory_space<vmem>>, vector<1x8x128xf32>,
    } else {
    }
    return
  }
  func.func @transform_0(%arg0: i32, %arg1: i32) -> (i32, i32) {
    %c1_i32 = arith.constant 1 : i32
    %0 = arith.muli %arg0, %c1_i32 : i32
    %1 = arith.addi %0, %arg1 : i32
    %c0_i32 = arith.constant 0 : i32
    %c0_i32_0 = arith.constant 0 : i32
    return %1, %c0_i32 : i32, i32
  }
  func.func @transform_1(%arg0: i32, %arg1: i32) -> (i32, i32) {
    %c1_i32 = arith.constant 1 : i32
    %0 = arith.muli %arg0, %c1_i32 : i32
    %1 = arith.addi %0, %arg1 : i32
    %c0_i32 = arith.constant 0 : i32
    %c0_i32_0 = arith.constant 0 : i32
    return %1, %c0_i32 : i32, i32
  }
  func.func @transform_2(%arg0: i32, %arg1: i32) -> (i32, i32, i32) {
    %c0_i32 = arith.constant 0 : i32
    %c0_i32_0 = arith.constant 0 : i32
    %c0_i32_1 = arith.constant 0 : i32
    return %arg0, %c0_i32, %c0_i32_0 : i32, i32, i32
  }
}

</mosaic_0001>

<llo_original>
// kernel: tpu_custom_call.1
$region0: #{tpu_custom_call.1}
  #allocation0 [shape = 'u32[]', space=smem, size = 0x4, offset = 0x4, fixed_abs, tag = 'smem constant byte address 0x4 - core index']
  #allocation1 [shape = 'u32[72,128]{1,0:T(1,128)}', space=vmem, size = 0x9000, scoped, tag = 'internal scratch']
  #allocation2 [shape = 'f32[8,128]{1,0:T(8,128)}', space=vmem, size = 0x1000, scoped, tag = 'scratch operand']
  %s0 = inlined_call_operand.hbm [shape: f32[16,128], index: 0, kind: input, shape index: {}]
  %s1 = inlined_call_operand.hbm [shape: f32[16,128], index: 1, kind: input, shape index: {}]
  %s2 = inlined_call_operand.hbm [shape: f32[2,8,128], index: 2, kind: output, shape index: {}]
  %s3 = sld [smem:[#allocation0]]
  $region65: #{tpu_custom_call.1} parent=0
    _
  %s5 = ssub.s32 1, %s3
  %s6 = scalar_select 0, %s5, %s3
  $region1: #{tpu_custom_call.1} parent=0
    #allocation3 [shape = 'u8[8192]{0}', space=vmem, size = 0x2000, scoped, tag = 'input window, operand 0']
    #allocation4 [shape = 's32[2]{0}', space=sflag, size = 0x8, scoped, tag = 'scoped memory for tpu_custom_call.1']
    #allocation5 [shape = 's32[2]{0}', space=sflag, size = 0x8, scoped, tag = 'scoped memory for tpu_custom_call.1']
    #allocation6 [shape = 'u8[8192]{0}', space=vmem, size = 0x2000, scoped, tag = 'input window, operand 1']
    #allocation7 [shape = 's32[2]{0}', space=sflag, size = 0x8, scoped, tag = 'scoped memory for tpu_custom_call.1']
    #allocation8 [shape = 'u8[8192]{0}', space=vmem, size = 0x2000, scoped, tag = 'output window, operand 0']
    %7 = vsyncpa [#allocation4], 0
    %s8 = scalar_lea.sflag [#allocation4], 1
    %9 = vsyncpa %s8, 0
    %10 = vsyncpa [#allocation7], 0
    %s11 = scalar_lea.sflag [#allocation7], 1
    %12 = vsyncpa %s11, 0
    %13 = vsyncpa [#allocation5], 0
    %s14 = scalar_lea.sflag [#allocation5], 1
    %15 = vsyncpa %s14, 0
    loop: start=0, step=1, limit=4
    $region2: #{tpu_custom_call.1} parent=1 // loop_pre_header
      _
    $region3: #{tpu_custom_call.1} parent=1 // loop_header
      %s17 = sphi 0, %s21
      %p18 = scmp.ge.s32.totalorder %s17, 4
      %s24 = sphi 0, %s36
      %s25 = sphi 0, %s32
      %s26 = sphi 0, %s24
      %s27 = sphi 0, %s25
      %s28 = sphi 0, %s26
      %s29 = sphi 0, %s27
      %s41 = sphi 0, %s43
      %s44 = sphi 0, %s41
      %s45 = sphi 0, %s44
      %s61 = sphi 0, %s45
      %s69 = sphi 0, %s71
      %s72 = sphi 0, %s69
      %s73 = sphi 0, %s72
      %s89 = sphi 0, %s73
      %s95 = sphi 0, %s97
      %s98 = sphi 0, %s95
      %s99 = sphi 0, %s98
      %s115 = sphi 0, %s99
    $region4: #{tpu_custom_call.1} parent=1 // loop_header_branch
      %20 = sbr.rel (%p18) target = $region8
    $region5: #{tpu_custom_call.1} parent=1 // loop_body
      %s22 = ssub.s32 %s17, 1
      %s23 = ssub.s32 %s17, 2
      %s30 = sadd.s32 1, %s25
      %p31 = scmp.ge.s32.totalorder %s30, 1
      %s32 = scalar_select %p31, 0, %s30
      %s33 = sadd.s32 1, %s24
      %s34 = scalar_select %p31, %s33, %s24
      %p35 = scmp.ge.s32.totalorder %s34, 2
      %s36 = scalar_select %p35, 0, %s34
      %s37 = sadd.s32 %s24, %s25
      %s38 = sadd.s32 %s36, %s32
      %s39 = ssub.s32 %s37, %s38
      %p40 = scmp.eq.s32.totalorder %s39, 0
      %s42 = sadd.s32 %s41, 1
      %s43 = scalar_select %p40, %s41, %s42
      %p46 = pneg %p40
      %p47 = scmp.eq.s32.totalorder %s17, 1
      %p48 = por %p46, %p47
      %p49 = scmp.ne.s32.totalorder %s41, %s44
      %p50 = scmp.eq.s32.totalorder %s17, 0
      %p51 = por %p49, %p50
      %p52 = scmp.ne.s32.totalorder %s41, %s44
      %p53 = scmp.eq.s32.totalorder %s22, 1
      %p54 = por %p52, %p53
      %p55 = scmp.ne.s32.totalorder %s44, %s45
      %p56 = scmp.eq.s32.totalorder %s22, 0
      %p57 = por %p55, %p56
      %p58 = scmp.ne.s32.totalorder %s44, %s45
      %p59 = scmp.eq.s32.totalorder %s23, 1
      %p60 = por %p58, %p59
      %p62 = scmp.ne.s32.totalorder %s45, %s61
      %p63 = scmp.eq.s32.totalorder %s23, 0
      %p64 = por %p62, %p63
      %s65 = sadd.s32 %s24, %s25
      %s66 = sadd.s32 %s36, %s32
      %s67 = ssub.s32 %s65, %s66
      %p68 = scmp.eq.s32.totalorder %s67, 0
      %s70 = sadd.s32 %s69, 1
      %s71 = scalar_select %p68, %s69, %s70
      %p74 = pneg %p68
      %p75 = scmp.eq.s32.totalorder %s17, 1
      %p76 = por %p74, %p75
      %p77 = scmp.ne.s32.totalorder %s69, %s72
      %p78 = scmp.eq.s32.totalorder %s17, 0
      %p79 = por %p77, %p78
      %p80 = scmp.ne.s32.totalorder %s69, %s72
      %p81 = scmp.eq.s32.totalorder %s22, 1
      %p82 = por %p80, %p81
      %p83 = scmp.ne.s32.totalorder %s72, %s73
      %p84 = scmp.eq.s32.totalorder %s22, 0
      %p85 = por %p83, %p84
      %p86 = scmp.ne.s32.totalorder %s72, %s73
      %p87 = scmp.eq.s32.totalorder %s23, 1
      %p88 = por %p86, %p87
      %p90 = scmp.ne.s32.totalorder %s73, %s89
      %p91 = scmp.eq.s32.totalorder %s23, 0
      %p92 = por %p90, %p91
      %s93 = ssub.s32 %s24, %s36
      %p94 = scmp.eq.s32.totalorder %s93, 0
      %s96 = sadd.s32 %s95, 1
      %s97 = scalar_select %p94, %s95, %s96
      %p100 = pneg %p94
      %p101 = scmp.eq.s32.totalorder %s17, 1
      %p102 = por %p100, %p101
      %p103 = scmp.ne.s32.totalorder %s95, %s98
      %p104 = scmp.eq.s32.totalorder %s17, 0
      %p105 = por %p103, %p104
      %p106 = scmp.ne.s32.totalorder %s95, %s98
      %p107 = scmp.eq.s32.totalorder %s22, 1
      %p108 = por %p106, %p107
      %p109 = scmp.ne.s32.totalorder %s98, %s99
      %p110 = scmp.eq.s32.totalorder %s22, 0
      %p111 = por %p109, %p110
      %p112 = scmp.ne.s32.totalorder %s98, %s99
      %p113 = scmp.eq.s32.totalorder %s23, 1
      %p114 = por %p112, %p113
      %p116 = scmp.ne.s32.totalorder %s99, %s115
      %p117 = scmp.eq.s32.totalorder %s23, 0
      %p118 = por %p116, %p117
      %p119 = scmp.le.s32.totalorder 1, %s17
      %p120 = scmp.lt.s32.totalorder %s17, 3
      %p121 = pnand %p119, %p120
      %p122 = pneg %p121
      // Predicated region
      $region9: #{tpu_custom_call.1} parent=5 // pred_check
        _
      $region10: #{tpu_custom_call.1} parent=5 // pred_check_branch
        %124 = sbr.rel (%p121) target = $region12
      $region11: #{tpu_custom_call.1} parent=5 // pred_region
        %s125 = ssub.s32 %s17, 1
      $region12: #{tpu_custom_call.1} parent=5 // pred_fallthru
        _
      %p126 = scmp.lt.s32.totalorder %s17, 2
      // Predicated region
      $region13: #{tpu_custom_call.1} parent=5 // pred_check
        %p127 = pneg %p126
      $region14: #{tpu_custom_call.1} parent=5 // pred_check_branch
        %129 = sbr.rel (%p127) target = $region16
      $region15: #{tpu_custom_call.1} parent=5 // pred_region
        // Predicated region
        $region17: #{tpu_custom_call.1} parent=15 // pred_check
          %p130 = pneg %p51
        $region18: #{tpu_custom_call.1} parent=15 // pred_check_branch
          %132 = sbr.rel (%p130) target = $region20
        $region19: #{tpu_custom_call.1} parent=15 // pred_region
          %s133 = sand.u32 %s41, 1
          %s134 = scalar_lea.sflag [#allocation4], %s133
          %s135 = sand.u32 %s41, 1
          %s136 = smul.addr %s135, 8
          %s137 = scalar_lea.vmem [#allocation3], %s136
          %s138 = sadd.s32 %s24, %s25
          %140 = vsyncadd %s134, 0
          %s141 = smul.addr %s138, 8
          %s142 = scalar_lea.hbm %s0, %s141
          %s144 = sshll.u32 %s142, 4
          %s145 = int_to_ptr.hbm [resolvable:$true] %s144
          %s146 = sshll.u32 %s137, 4
          %s147 = int_to_ptr.vmem [resolvable:$true] %s146
          %149 = dma.hbm_to_vmem [thread:$0]  %s145, 128, %s147, %s134
        $region20: #{tpu_custom_call.1} parent=15 // pred_fallthru
          _
        // Predicated region
        $region21: #{tpu_custom_call.1} parent=15 // pred_check
          %p150 = pneg %p79
        $region22: #{tpu_custom_call.1} parent=15 // pred_check_branch
          %152 = sbr.rel (%p150) target = $region24
        $region23: #{tpu_custom_call.1} parent=15 // pred_region
          %s153 = sand.u32 %s69, 1
          %s154 = scalar_lea.sflag [#allocation7], %s153
          %s155 = sand.u32 %s69, 1
          %s156 = smul.addr %s155, 8
          %s157 = scalar_lea.vmem [#allocation6], %s156
          %s158 = sadd.s32 %s24, %s25
          %160 = vsyncadd %s154, 0
          %s161 = smul.addr %s158, 8
          %s162 = scalar_lea.hbm %s1, %s161
          %s164 = sshll.u32 %s162, 4
          %s165 = int_to_ptr.hbm [resolvable:$true] %s164
          %s166 = sshll.u32 %s157, 4
          %s167 = int_to_ptr.vmem [resolvable:$true] %s166
          %169 = dma.hbm_to_vmem [thread:$0]  %s165, 128, %s167, %s154
        $region24: #{tpu_custom_call.1} parent=15 // pred_fallthru
          _
      $region16: #{tpu_custom_call.1} parent=5 // pred_fallthru
        _
      %p170 = scmp.le.s32.totalorder 1, %s17
      %p171 = scmp.lt.s32.totalorder %s17, 3
      %p172 = pnand %p170, %p171
      %p173 = pneg %p172
      // Predicated region
      $region25: #{tpu_custom_call.1} parent=5 // pred_check
        _
      $region26: #{tpu_custom_call.1} parent=5 // pred_check_branch
        %175 = sbr.rel (%p172) target = $region28
      $region27: #{tpu_custom_call.1} parent=5 // pred_region
        %s176 = ssub.s32 %s17, 1
        %s177 = sand.u32 %s44, 1
        %s178 = scalar_lea.sflag [#allocation4], %s177
        %s179 = sand.u32 %s44, 1
        %s180 = smul.addr %s179, 8
        %s181 = scalar_lea.vmem [#allocation3], %s180
        // Predicated region
        $region29: #{tpu_custom_call.1} parent=27 // pred_check
          %p182 = pneg %p57
        $region30: #{tpu_custom_call.1} parent=27 // pred_check_branch
          %184 = sbr.rel (%p182) target = $region32
        $region31: #{tpu_custom_call.1} parent=27 // pred_region
          %186 = dma.done %s178, 128
        $region32: #{tpu_custom_call.1} parent=27 // pred_fallthru
          _
        %s187 = sand.u32 %s72, 1
        %s188 = scalar_lea.sflag [#allocation7], %s187
        %s189 = sand.u32 %s72, 1
        %s190 = smul.addr %s189, 8
        %s191 = scalar_lea.vmem [#allocation6], %s190
        // Predicated region
        $region33: #{tpu_custom_call.1} parent=27 // pred_check
          %p192 = pneg %p85
        $region34: #{tpu_custom_call.1} parent=27 // pred_check_branch
          %194 = sbr.rel (%p192) target = $region36
        $region35: #{tpu_custom_call.1} parent=27 // pred_region
          %196 = dma.done %s188, 128
        $region36: #{tpu_custom_call.1} parent=27 // pred_fallthru
          _
        %s197 = sand.u32 %s44, 1
        %s198 = scalar_lea.sflag [#allocation4], %s197
        %s199 = sand.u32 %s44, 1
        %s200 = smul.addr %s199, 8
        %s201 = scalar_lea.vmem [#allocation3], %s200
        %p202 = pneg %p57
        %p203 = pneg %p54
        %s204 = sand.u32 %s72, 1
        %s205 = scalar_lea.sflag [#allocation7], %s204
        %s206 = sand.u32 %s72, 1
        %s207 = smul.addr %s206, 8
        %s208 = scalar_lea.vmem [#allocation6], %s207
        %p209 = pneg %p85
        %p210 = pneg %p82
        %p211 = pneg %p111
        %p212 = pneg %p108
        %s213 = sand.u32 %s98, 1
        %s214 = scalar_lea.sflag [#allocation5], %s213
        %s215 = sand.u32 %s98, 1
        %s216 = smul.addr %s215, 8
        %s217 = scalar_lea.vmem [#allocation8], %s216
        %s218 = sadd.s32 %s26, %s27
        %s219 = sadd.s32 %s26, %s27
        %p220 = scmp.eq.s32.totalorder %s27, 0
        // Predicated region
        $region37: #{tpu_custom_call.1} parent=27 // pred_check
          %p221 = pneg %p220
        $region38: #{tpu_custom_call.1} parent=27 // pred_check_branch
          %223 = sbr.rel (%p221) target = $region40
        $region39: #{tpu_custom_call.1} parent=27 // pred_region
          %224 = vst [vmem:[#allocation2] sm:$0xff] 0.0
        $region40: #{tpu_custom_call.1} parent=27 // pred_fallthru
          _
        %v225 = vld [vmem:[%s181] sm:$0xff]
        %v226 = vmul.f32 %v225, %v225
        %v227 = vrcp.pop %v226
        %v228 = vmul.f32 %v226, %v227
        %v229 = vsub.f32 1.0, %v228
        %v230 = vmul.f32 %v227, %v229
        %v231 = vadd.f32 %v227, %v230
        %vm232 = vweird.f32 %v226
        %vm233 = vweird.f32 %v227
        %vm234 = vmor %vm232, %vm233
        %v235 = vsel %vm234, %v227, %v231
        %v236 = vand.u32 2147483647, %v226
        %vm237 = vcmp.eq.f32.partialorder %v236, 8.507059e+37
        %v238 = vand.u32 %v226, 2147483648
        %v239 = vor.u32 1.1754944e-38, %v238
        %v240 = vsel %vm237, %v239, %v235
        %v241 = vmul.f32 %v240, 0.5
        %v242 = vld [vmem:[%s191] sm:$0xff]
        %v243 = vmul.f32 %v241, %v242
        %v244 = vadd.f32 %v226, 1.0
        %v245 = vlog2.pop %v244
        %v246 = vmul.f32 %v245, 0.6931472
        %v247 = vadd.f32 %v243, %v246
        %s248 = sadd.s32 %s26, %s27
        %s249 = smul.u32 %s248, 1024
        %s250 = sadd.s32 %s249, 1024
        %p251 = scmp.le.s32.totalorder %s250, 2
        // Predicated region
        $region41: #{tpu_custom_call.1} parent=27 // pred_check
          %p252 = pneg %p251
        $region42: #{tpu_custom_call.1} parent=27 // pred_check_branch
          %254 = sbr.rel (%p252) target = $region44
        $region43: #{tpu_custom_call.1} parent=27 // pred_region
          %v255 = vld [vmem:[#allocation2] sm:$0xff]
          %v256 = vadd.f32 %v255, %v247
          %257 = vst [vmem:[#allocation2] sm:$0xff] %v256
        $region44: #{tpu_custom_call.1} parent=27 // pred_fallthru
          _
        %p258 = scmp.gt.s32.totalorder %s250, 2
        // Predicated region
        $region45: #{tpu_custom_call.1} parent=27 // pred_check
          %p259 = pneg %p258
        $region46: #{tpu_custom_call.1} parent=27 // pred_check_branch
          %261 = sbr.rel (%p259) target = $region48
        $region47: #{tpu_custom_call.1} parent=27 // pred_region
          %v262 = vlaneseq
          %v263 = vshrl.u32 %v262, 7
          %v264 = vlaneseq
          %v265 = vand.u32 %v264, 127
          %v266 = vmul.u32 %v263, 128
          %v267 = vstv %s249
          %v268 = vadd.s32 %v267, %v266
          %v269 = vadd.s32 %v268, %v265
          %v270 = vld [vmem:[#allocation2] sm:$0xff]
          %vm271 = vcmp.lt.s32.totalorder %v269, 2
          %v272 = vsel %vm271, %v247, 0.0
          %v273 = vadd.f32 %v270, %v272
          %274 = vst [vmem:[#allocation2] sm:$0xff] %v273
        $region48: #{tpu_custom_call.1} parent=27 // pred_fallthru
          _
        // Predicated region
        $region49: #{tpu_custom_call.1} parent=27 // pred_check
          %p275 = pneg %p220
        $region50: #{tpu_custom_call.1} parent=27 // pred_check_branch
          %277 = sbr.rel (%p275) target = $region52
        $region51: #{tpu_custom_call.1} parent=27 // pred_region
          %v278 = vld [vmem:[#allocation2] sm:$0xff]
          %279 = vst [vmem:[%s217] sm:$0xff] %v278
        $region52: #{tpu_custom_call.1} parent=27 // pred_fallthru
          _
        %s280 = sand.u32 %s98, 1
        %s281 = scalar_lea.sflag [#allocation5], %s280
        %s282 = sand.u32 %s98, 1
        %s283 = smul.addr %s282, 8
        %s284 = scalar_lea.vmem [#allocation8], %s283
        // Predicated region
        $region53: #{tpu_custom_call.1} parent=27 // pred_check
          %p285 = pneg %p108
        $region54: #{tpu_custom_call.1} parent=27 // pred_check_branch
          %287 = sbr.rel (%p285) target = $region56
        $region55: #{tpu_custom_call.1} parent=27 // pred_region
          %289 = vsyncadd %s281, 0
          %s290 = smul.addr %s26, 8
          %s291 = scalar_lea.hbm %s2, %s290
          %s293 = sshll.u32 %s284, 4
          %s294 = int_to_ptr.vmem [resolvable:$true] %s293
          %s295 = sshll.u32 %s291, 4
          %s296 = int_to_ptr.hbm [resolvable:$true] %s295
          %298 = dma.vmem_to_hbm [thread:$0]  %s294, 128, %s296, %s281
        $region56: #{tpu_custom_call.1} parent=27 // pred_fallthru
          _
      $region28: #{tpu_custom_call.1} parent=5 // pred_fallthru
        _
      %p299 = scmp.le.s32.totalorder 2, %s17
      // Predicated region
      $region57: #{tpu_custom_call.1} parent=5 // pred_check
        %p300 = pneg %p299
      $region58: #{tpu_custom_call.1} parent=5 // pred_check_branch
        %302 = sbr.rel (%p300) target = $region60
      $region59: #{tpu_custom_call.1} parent=5 // pred_region
        %s303 = ssub.s32 %s17, 2
        // Predicated region
        $region61: #{tpu_custom_call.1} parent=59 // pred_check
          %p304 = pneg %p114
        $region62: #{tpu_custom_call.1} parent=59 // pred_check_branch
          %306 = sbr.rel (%p304) target = $region64
        $region63: #{tpu_custom_call.1} parent=59 // pred_region
          %s307 = sand.u32 %s99, 1
          %s308 = scalar_lea.sflag [#allocation5], %s307
          %s309 = sand.u32 %s99, 1
          %s310 = smul.addr %s309, 8
          %s311 = scalar_lea.vmem [#allocation8], %s310
          %313 = dma.done %s308, 128
        $region64: #{tpu_custom_call.1} parent=59 // pred_fallthru
          _
      $region60: #{tpu_custom_call.1} parent=5 // pred_fallthru
        _
    $region6: #{tpu_custom_call.1} parent=1 // loop_footer
      %s21 = sadd.s32 1, %s17
    $region7: #{tpu_custom_call.1} parent=1 // loop_footer_branch
      %16 = sbr.rel target = $region3
    $region8: #{tpu_custom_call.1} parent=1 // loop_exit
      _
    %314 = vsyncpa [#allocation4], 1
    %s315 = scalar_lea.sflag [#allocation4], 1
    %316 = vsyncpa %s315, 1
    %317 = vsyncpa [#allocation7], 1
    %s318 = scalar_lea.sflag [#allocation7], 1
    %319 = vsyncpa %s318, 1
    %320 = vsyncpa [#allocation5], 1
    %s321 = scalar_lea.sflag [#allocation5], 1
    %322 = vsyncpa %s321, 1

</llo_original>
